<compile_context>
chip_gen: v7x
topology: tpu7x:2x2x1
jax: 0.10.0
libtpu: 0.0.40
codegen_flags: <defaults>
</compile_context>

<pallas_src>
import jax
import jax.numpy as jnp
from jax.experimental import pallas as pl
from jax.experimental.pallas import tpu as pltpu

# TODO(synk): params['EPS'] is an external global in the reference code; we fix
# it deterministically here.
EPS = 1e-7

_VMEM_LIMIT_BYTES = 48 * 1024 * 1024   # headroom for v7x (64 MiB physical VMEM)
_Z_TILE_BYTES = 8 * 1024 * 1024        # per z buffer; x2 for double buffering
_MAX_W_BYTES = 2 * 1024 * 1024         # above this, skip the block-diag MXU path


def _ec_matmul_kernel(z_ref, w_ref, out_ref):
    # z_ref: (TB, C*K)   w_ref: (C*K, C) block-diagonal -log(p)   out_ref: (TB, C)
    out_ref[...] = jnp.dot(
        z_ref[...], w_ref[...], preferred_element_type=jnp.float32
    ).astype(out_ref.dtype)


def _ec_elementwise_kernel(z_ref, nlp_ref, out_ref):
    # z_ref: (TB, C, K)   nlp_ref: (C, K) = -log(p)   out_ref: (TB, C)
    prod = z_ref[...] * nlp_ref[...][None, :, :]      # promotes to f32
    out_ref[...] = jnp.sum(prod, axis=2).astype(out_ref.dtype)


def _pick_batch_tile(batch, row_bytes):
    tb = _Z_TILE_BYTES // max(row_bytes, 1)
    tb = max(8, (tb // 8) * 8)
    tb = min(tb, 2048)
    return batch if tb >= batch else tb


def independent_entropy_coding_forward(z, probs, eps=EPS, batch_tile=None):
    """z: (B, code_dim, codebook_dim); probs: (1, code_dim, codebook_dim)."""
    B, C, K = z.shape
    itemsize = jnp.dtype(z.dtype).itemsize

    # Hoisted (batch-independent) clipped log-softmax of the probs parameter.
    probs2d = probs.reshape(C, K).astype(jnp.float32)
    p = jnp.clip(jax.nn.softmax(probs2d, axis=-1), eps, 1.0 - eps)
    neg_logp = -jnp.log(p)                                    # (C, K), f32

    if batch_tile is None:
        tb = _pick_batch_tile(B, C * K * itemsize)
    else:
        tb = B if batch_tile >= B else max(8, (batch_tile // 8) * 8)
    grid = (pl.cdiv(B, tb),)

    cost = pl.CostEstimate(
        flops=2 * B * C * K,
        transcendentals=0,
        bytes_accessed=(B * C * K + C * K + B * C) * itemsize,
    )
    cparams = pltpu.CompilerParams(
        dimension_semantics=("parallel",),
        vmem_limit_bytes=_VMEM_LIMIT_BYTES,
    )

    if C * K * C * itemsize <= _MAX_W_BYTES:
        # Block-diagonal weight: W[(c, k), c'] = -log p[c, k] if c == c' else 0.
        w = neg_logp[:, :, None] * jnp.eye(C, dtype=jnp.float32)[:, None, :]
        w = w.reshape(C * K, C).astype(z.dtype)
        z_flat = z.reshape(B, C * K)
        return pl.pallas_call(
            _ec_matmul_kernel,
            out_shape=jax.ShapeDtypeStruct((B, C), z.dtype),
            grid=grid,
            in_specs=[
                pl.BlockSpec((tb, C * K), lambda i: (i, 0)),
                pl.BlockSpec((C * K, C), lambda i: (0, 0)),
            ],
            out_specs=pl.BlockSpec((tb, C), lambda i: (i, 0)),
            compiler_params=cparams,
            cost_estimate=cost,
        )(z_flat, w)

    # Fallback: elementwise multiply + reduction on the natural (TB, C, K) layout.
    return pl.pallas_call(
        _ec_elementwise_kernel,
        out_shape=jax.ShapeDtypeStruct((B, C), z.dtype),
        grid=grid,
        in_specs=[
            pl.BlockSpec((tb, C, K), lambda i: (i, 0, 0)),
            pl.BlockSpec((C, K), lambda i: (0, 0)),
        ],
        out_specs=pl.BlockSpec((tb, C), lambda i: (i, 0)),
        compiler_params=cparams,
        cost_estimate=cost,
    )(z, neg_logp)


def _reference(z, probs, eps=EPS):
    p = jnp.clip(jax.nn.softmax(probs.astype(jnp.float32), axis=-1), eps, 1.0 - eps)
    return -jnp.sum(z.astype(jnp.float32) * jnp.log(p), axis=2)


if __name__ == "__main__":
    batch = 2
    code_dim = 8
    codebook_dim = 32

    key = jax.random.PRNGKey(0)
    kz, kz2 = jax.random.split(key)
    z = jax.random.normal(kz, (batch, code_dim, codebook_dim), dtype=jnp.float32)

    # Parameter init matches the PyTorch module: torch.ones(1, code_dim, codebook_dim)
    probs = jnp.ones((1, code_dim, codebook_dim), dtype=jnp.float32)

    out = jax.block_until_ready(independent_entropy_coding_forward(z, probs))
    ref = _reference(z, probs)
    assert out.shape == (batch, code_dim)
    assert jnp.allclose(out, ref, atol=1e-5, rtol=1e-5)

    # Also exercise the batch-tiled (grid + double-buffered DMA) path.
    z_big = jax.random.normal(kz2, (24, code_dim, codebook_dim), dtype=jnp.float32)
    out_big = jax.block_until_ready(
        independent_entropy_coding_forward(z_big, probs, batch_tile=8))
    assert out_big.shape == (24, code_dim)
    assert jnp.allclose(out_big, _reference(z_big, probs), atol=1e-5, rtol=1e-5)

    print("KERNEL_OK")
</pallas_src>

<mosaic_0001>
module attributes {stable_mosaic.version = 11 : i64} {
  func.func @_ec_matmul_kernel(%arg0: i32, %arg1: memref<2x256xf32, #tpu.memory_space<vmem>>, %arg2: memref<256x8xf32, #tpu.memory_space<vmem>>, %arg3: memref<2x8xf32, #tpu.memory_space<vmem>>) attributes {dimension_semantics = [#tpu.dimension_semantics<parallel>], iteration_bounds = array<i64: 1>, scalar_prefetch = 0 : i64, scratch_operands = 0 : i64, tpu.core_type = #tpu.core_type<tc>, window_params = [{transform_indices = @transform_0, window_bounds = array<i64: 2, 256>}, {pipeline_mode = #tpu.pipeline_mode<synchronous>, transform_indices = @transform_1, window_bounds = array<i64: 256, 8>}, {transform_indices = @transform_2, window_bounds = array<i64: 2, 8>}]} {
    %c0 = arith.constant 0 : index
    %c0_0 = arith.constant 0 : index
    %0 = vector.load %arg1[%c0, %c0_0] : memref<2x256xf32, #tpu.memory_space<vmem>>, vector<2x256xf32>
    %c0_1 = arith.constant 0 : index
    %c0_2 = arith.constant 0 : index
    %1 = vector.load %arg2[%c0_1, %c0_2] : memref<256x8xf32, #tpu.memory_space<vmem>>, vector<256x8xf32>
    %cst = arith.constant dense<0.000000e+00> : vector<2x8xf32>
    %2 = tpu.matmul %0, %1, %cst {dimension_numbers = #tpu.dot_dimension_numbers<[1], [0], [0], [1], [0, 0, 1, 1], [], []>} : vector<2x256xf32>, vector<256x8xf32>, vector<2x8xf32> -> vector<2x8xf32>
    %c0_3 = arith.constant 0 : index
    %c0_4 = arith.constant 0 : index
    %3 = vector.load %arg3[%c0_3, %c0_4] : memref<2x8xf32, #tpu.memory_space<vmem>>, vector<2x8xf32>
    tpu.vector_store %arg3[%c0_3, %c0_4], %2 {strides = array<i32>} : memref<2x8xf32, #tpu.memory_space<vmem>>, vector<2x8xf32>,
    return
  }
  func.func @transform_0(%arg0: i32) -> (i32, i32) {
    %c0_i32 = arith.constant 0 : i32
    %c0_i32_0 = arith.constant 0 : i32
    return %arg0, %c0_i32 : i32, i32
  }
  func.func @transform_1(%arg0: i32) -> (i32, i32) {
    %c0_i32 = arith.constant 0 : i32
    %c0_i32_0 = arith.constant 0 : i32
    %c0_i32_1 = arith.constant 0 : i32
    return %c0_i32, %c0_i32_0 : i32, i32
  }
  func.func @transform_2(%arg0: i32) -> (i32, i32) {
    %c0_i32 = arith.constant 0 : i32
    %c0_i32_0 = arith.constant 0 : i32
    return %arg0, %c0_i32 : i32, i32
  }
}

</mosaic_0001>

<llo_original>
// kernel: tpu_custom_call.1
$region0: #{tpu_custom_call.1}
  #allocation0 [shape = 'u32[]', space=smem, size = 0x4, offset = 0x4, fixed_abs, tag = 'smem constant byte address 0x4 - core index']
  #allocation1 [shape = 'u32[144,128]{1,0:T(1,128)}', space=vmem, size = 0x12000, scoped, tag = 'internal scratch']
  %s0 = inlined_call_operand.vmem [shape: f32[2,256], index: 0, kind: input, shape index: {}]
  %s1 = inlined_call_operand.vmem [shape: f32[256,8], index: 1, kind: input, shape index: {}]
  %s2 = inlined_call_operand.hbm [shape: f32[2,8], index: 2, kind: output, shape index: {}]
  %s3 = sld [smem:[#allocation0]]
  $region18: #{tpu_custom_call.1} parent=0
    _
  %s5 = ssub.s32 1, %s3
  %s6 = scalar_select 0, %s5, %s3
  $region1: #{tpu_custom_call.1} parent=0
    #allocation2 [shape = 'u8[1024]{0}', space=vmem, size = 0x400, scoped, tag = 'output window, operand 0, single buffered']
    #allocation3 [shape = 's32[1]{0}', space=sflag, size = 0x4, scoped, tag = 'scoped memory for tpu_custom_call.1']
    %7 = vsyncpa [#allocation3], 0
    // Predicated region
    $region2: #{tpu_custom_call.1} parent=1 // pred_check
      _
    $region3: #{tpu_custom_call.1} parent=1 // pred_check_branch
      %9 = sbr.rel (0) target = $region5
    $region4: #{tpu_custom_call.1} parent=1 // pred_region
      _
    $region5: #{tpu_custom_call.1} parent=1 // pred_fallthru
      _
    // Predicated region
    $region6: #{tpu_custom_call.1} parent=1 // pred_check
      _
    $region7: #{tpu_custom_call.1} parent=1 // pred_check_branch
      %11 = sbr.rel (0) target = $region9
    $region8: #{tpu_custom_call.1} parent=1 // pred_region
      _
    $region9: #{tpu_custom_call.1} parent=1 // pred_fallthru
      _
    %v12 = vld [vmem:[%s0] sm:$0xf]
    %v13 = vld [vmem:[%s1] sm:$0xff]
    %v14 = vld [vmem:[%s1 + $0x8] sm:$0xff]
    %v15 = vld [vmem:[%s1 + $0x10] sm:$0xff]
    %v16 = vld [vmem:[%s1 + $0x18] sm:$0xff]
    %v17 = vld [vmem:[%s1 + $0x20] sm:$0xff]
    %v18 = vld [vmem:[%s1 + $0x28] sm:$0xff]
    %v19 = vld [vmem:[%s1 + $0x30] sm:$0xff]
    %v20 = vld [vmem:[%s1 + $0x38] sm:$0xff]
    %v21 = vld [vmem:[%s1 + $0x40] sm:$0xff]
    %v22 = vld [vmem:[%s1 + $0x48] sm:$0xff]
    %v23 = vld [vmem:[%s1 + $0x50] sm:$0xff]
    %v24 = vld [vmem:[%s1 + $0x58] sm:$0xff]
    %v25 = vld [vmem:[%s1 + $0x60] sm:$0xff]
    %v26 = vld [vmem:[%s1 + $0x68] sm:$0xff]
    %v27 = vld [vmem:[%s1 + $0x70] sm:$0xff]
    %v28 = vld [vmem:[%s1 + $0x78] sm:$0xff]
    %v29 = vld [vmem:[%s1 + $0x80] sm:$0xff]
    %v30 = vld [vmem:[%s1 + $0x88] sm:$0xff]
    %v31 = vld [vmem:[%s1 + $0x90] sm:$0xff]
    %v32 = vld [vmem:[%s1 + $0x98] sm:$0xff]
    %v33 = vld [vmem:[%s1 + $0xa0] sm:$0xff]
    %v34 = vld [vmem:[%s1 + $0xa8] sm:$0xff]
    %v35 = vld [vmem:[%s1 + $0xb0] sm:$0xff]
    %v36 = vld [vmem:[%s1 + $0xb8] sm:$0xff]
    %v37 = vld [vmem:[%s1 + $0xc0] sm:$0xff]
    %v38 = vld [vmem:[%s1 + $0xc8] sm:$0xff]
    %v39 = vld [vmem:[%s1 + $0xd0] sm:$0xff]
    %v40 = vld [vmem:[%s1 + $0xd8] sm:$0xff]
    %v41 = vld [vmem:[%s1 + $0xe0] sm:$0xff]
    %v42 = vld [vmem:[%s1 + $0xe8] sm:$0xff]
    %v43 = vld [vmem:[%s1 + $0xf0] sm:$0xff]
    %v44 = vld [vmem:[%s1 + $0xf8] sm:$0xff]
    %v47 = vunpack.c.l.s4 1983009808
    %v48 = vunpack.c.0.s8 %v47
    %v49 = vlaneseq
    %v50 = vshrl.u32 %v49, 7
    %v51 = vsub.s32 %v48, %v50
    %v52 = vrot.slane %v12, %v51
    %v53 = vcombine.high %v52, %v52
    %56 = vmatprep.subr.mxu0 0.0
    %57 = vmatpush1.msra.mxu0 %v13
    %58 = vmatprep.subr.mxu0 0.0
    %59 = vmatpush1.msra.mxu0 %v14
    %60 = vmatprep.subr.mxu0 0.0
    %61 = vmatpush1.msra.mxu0 %v15
    %62 = vmatprep.subr.mxu0 0.0
    %63 = vmatpush1.msra.mxu0 %v16
    %64 = vmatprep.subr.mxu0 0.0
    %65 = vmatpush1.msra.mxu0 %v17
    %66 = vmatprep.subr.mxu0 0.0
    %67 = vmatpush1.msra.mxu0 %v18
    %68 = vmatprep.subr.mxu0 0.0
    %69 = vmatpush1.msra.mxu0 %v19
    %70 = vmatprep.subr.mxu0 0.0
    %71 = vmatpush1.msra.mxu0 %v20
    %72 = vmatprep.subr.mxu0 0.0
    %73 = vmatpush1.msra.mxu0 %v21
    %74 = vmatprep.subr.mxu0 0.0
    %75 = vmatpush1.msra.mxu0 %v22
    %76 = vmatprep.subr.mxu0 0.0
    %77 = vmatpush1.msra.mxu0 %v23
    %78 = vmatprep.subr.mxu0 0.0
    %79 = vmatpush1.msra.mxu0 %v24
    %80 = vmatprep.subr.mxu0 0.0
    %81 = vmatpush1.msra.mxu0 %v25
    %82 = vmatprep.subr.mxu0 0.0
    %83 = vmatpush1.msra.mxu0 %v26
    %84 = vmatprep.subr.mxu0 0.0
    %85 = vmatpush1.msra.mxu0 %v27
    %86 = vmatprep.subr.mxu0 0.0
    %87 = vmatpush1.msra.mxu0 %v28
    %88 = vmatprep.subr.mxu0 0.0
    %89 = vmatpush1.msra.mxu0 %v29
    %90 = vmatprep.subr.mxu0 0.0
    %91 = vmatpush1.msra.mxu0 %v30
    %92 = vmatprep.subr.mxu0 0.0
    %93 = vmatpush1.msra.mxu0 %v31
    %94 = vmatprep.subr.mxu0 0.0
    %95 = vmatpush1.msra.mxu0 %v32
    %96 = vmatprep.subr.mxu0 0.0
    %97 = vmatpush1.msra.mxu0 %v33
    %98 = vmatprep.subr.mxu0 0.0
    %99 = vmatpush1.msra.mxu0 %v34
    %100 = vmatprep.subr.mxu0 0.0
    %101 = vmatpush1.msra.mxu0 %v35
    %102 = vmatprep.subr.mxu0 0.0
    %103 = vmatpush1.msra.mxu0 %v36
    %104 = vmatprep.subr.mxu0 0.0
    %105 = vmatpush1.msra.mxu0 %v37
    %106 = vmatprep.subr.mxu0 0.0
    %107 = vmatpush1.msra.mxu0 %v38
    %108 = vmatprep.subr.mxu0 0.0
    %109 = vmatpush1.msra.mxu0 %v39
    %110 = vmatprep.subr.mxu0 0.0
    %111 = vmatpush1.msra.mxu0 %v40
    %112 = vmatprep.subr.mxu0 0.0
    %113 = vmatpush1.msra.mxu0 %v41
    %114 = vmatprep.subr.mxu0 0.0
    %115 = vmatpush1.msra.mxu0 %v42
    %116 = vmatprep.subr.mxu0 0.0
    %117 = vmatpush1.msra.mxu0 %v43
    %118 = vmatprep.subr.mxu0 0.0
    %119 = vmatpush1.msra.mxu0 %v44
    %120 = vmatprep.mubr.f32.mxu0 %v53
    %121 = vmatmul.mubr.f32.gmra.mrb[0].mxu0 %v52
    %v122 = vpop.f32.mrb[0].mxu0
    %v123 = vadd.f32 0.0, %v122
    %v124 = vpop.f32.mrb[0].mxu0
    %125 = vdwg.mxu0
    %vm126 = vcmask 58368
    %127 = vst.msk [vmem:[#allocation2] sm:$0x3] %vm126, %v123
    // Predicated region
    $region10: #{tpu_custom_call.1} parent=1 // pred_check
      _
    $region11: #{tpu_custom_call.1} parent=1 // pred_check_branch
      %129 = sbr.rel (0) target = $region13
    $region12: #{tpu_custom_call.1} parent=1 // pred_region
      %s131 = ssub.s32 32, 32
      %132 = vsyncadd [#allocation3], %s131
      %s134 = sshll.u32 [#allocation2], 4
      %s135 = int_to_ptr.vmem [resolvable:$true] %s134
      %137 = dma.vmem_to_hbm [thread:$0]  %s135, 32, %s2, [#allocation3]
    $region13: #{tpu_custom_call.1} parent=1 // pred_fallthru
      _
    // Predicated region
    $region14: #{tpu_custom_call.1} parent=1 // pred_check
      _
    $region15: #{tpu_custom_call.1} parent=1 // pred_check_branch
      %139 = sbr.rel (0) target = $region17
    $region16: #{tpu_custom_call.1} parent=1 // pred_region
      %140 = dma.done [#allocation3], 32
    $region17: #{tpu_custom_call.1} parent=1 // pred_fallthru
      _
    %141 = vsyncpa [#allocation3], 1

</llo_original>
